<compile_context>
chip_gen: v7x
topology: tpu7x:2x2x1
jax: 0.10.0
libtpu: 0.0.40
codegen_flags: <defaults>
</compile_context>

<pallas_src>
import functools

import jax
import jax.numpy as jnp
import numpy as np
from jax import lax
from jax.experimental import pallas as pl
from jax.experimental.pallas import tpu as pltpu

_LANES = 512          # lane-dense last dim (multiple of 128)
_TILE_ROWS = 1024     # 1024 x 512 f32 = 2 MiB per output tile buffer
_MIN_TILE_ROWS = 128  # below this: single block; above: >= 2 tiles (v7x has 2 TCs)


def _round_up(x, m):
    return ((x + m - 1) // m) * m


def _bits_to_actions(bits_u32, *, scale, offset, hi_cap):
    """uint32 random bits -> uniform actions in [low, high) (float32)."""
    # Mantissa trick: 23 random bits -> float32 in [1, 2); subtract 1 -> U[0, 1).
    mant = (bits_u32 >> jnp.uint32(9)) | jnp.uint32(0x3F800000)
    u01 = lax.bitcast_convert_type(mant, jnp.float32) - jnp.float32(1.0)
    vals = u01 * jnp.float32(scale) + jnp.float32(offset)
    # Guard against float32 rounding ever producing exactly `high` (strict [low, high)).
    return jnp.minimum(vals, jnp.float32(hi_cap))


def _rand_action_kernel(seed_ref, out_ref, *, scale, offset, hi_cap):
    """Write-only kernel: on-chip PRNG -> uniform actions in [low, high)."""
    # Distinct stream per grid tile (otherwise every tile repeats the same randoms).
    pltpu.prng_seed(seed_ref[0] + pl.program_id(0))
    bits = pltpu.prng_random_bits(out_ref.shape)
    if bits.dtype != jnp.uint32:
        bits = pltpu.bitcast(bits, jnp.uint32)
    out_ref[...] = _bits_to_actions(bits, scale=scale, offset=offset, hi_cap=hi_cap)


def _bits_action_kernel(bits_ref, out_ref, *, scale, offset, hi_cap):
    """Fallback (non-TPU backends only): random bits supplied by the wrapper."""
    out_ref[...] = _bits_to_actions(
        bits_ref[...], scale=scale, offset=offset, hi_cap=hi_cap)


def random_policy_forward(states, mu, explore, *, action_dim, action_space, seed):
    """JAX wrapper mirroring RandomPolicy.forward(states, mu, explore)."""
    del mu, explore  # unused; kept for API parity with the PyTorch module
    batch = states.shape[0]
    low = float(action_space[0])
    high = float(action_space[1])
    total = batch * action_dim

    scale = high - low
    hi_cap = max(float(np.nextafter(np.float32(high), np.float32(-np.inf))), low)

    # Lane-dense slab: rows rounded only to a sublane multiple (8); the last
    # grid block may be partial (no tile-rows padding, no over-generation).
    rows = _round_up(max(pl.cdiv(total, _LANES), 1), 8)
    if rows <= _MIN_TILE_ROWS:
        tile_rows = rows  # tiny output: a single block
    else:
        # At least 2 tiles (shards across both v7x TensorCores), capped at 2 MiB.
        tile_rows = min(_TILE_ROWS, _round_up(pl.cdiv(rows, 2), 8))
    n_tiles = pl.cdiv(rows, tile_rows)

    if jax.default_backend() == "tpu":
        kernel = functools.partial(
            _rand_action_kernel, scale=scale, offset=low, hi_cap=hi_cap)
        flat = pl.pallas_call(
            kernel,
            out_shape=jax.ShapeDtypeStruct((rows, _LANES), jnp.float32),
            grid_spec=pltpu.PrefetchScalarGridSpec(
                num_scalar_prefetch=1,
                grid=(n_tiles,),
                in_specs=[],
                out_specs=pl.BlockSpec((tile_rows, _LANES),
                                       lambda i, seed_ref: (i, 0)),
            ),
            compiler_params=pltpu.CompilerParams(
                dimension_semantics=("parallel",),
                vmem_limit_bytes=32 * 1024 * 1024,
            ),
        )(jnp.asarray([seed], dtype=jnp.int32))
    else:
        # TODO(synk): interpret/CPU-only fallback -- pltpu.prng_* has no non-TPU
        # lowering, so bits are produced by the wrapper and streamed in instead.
        key = jax.random.PRNGKey(seed)
        bits = jax.random.bits(key, (rows, _LANES), dtype=jnp.uint32)
        kernel = functools.partial(
            _bits_action_kernel, scale=scale, offset=low, hi_cap=hi_cap)
        flat = pl.pallas_call(
            kernel,
            out_shape=jax.ShapeDtypeStruct((rows, _LANES), jnp.float32),
            grid=(n_tiles,),
            in_specs=[pl.BlockSpec((tile_rows, _LANES), lambda i: (i, 0))],
            out_specs=pl.BlockSpec((tile_rows, _LANES), lambda i: (i, 0)),
        )(bits)

    if rows * _LANES == total:
        return flat.reshape(batch, action_dim)
    return flat.reshape(-1)[:total].reshape(batch, action_dim)


if __name__ == "__main__":
    key = jax.random.PRNGKey(0)
    k_states, k_mu, k_seed = jax.random.split(key, 3)

    batch, state_dim, mu_dim, action_dim = 8, 4, 16, 4
    action_space = (-1.0, 1.0)

    states = jax.random.normal(k_states, (batch, state_dim), dtype=jnp.float32)
    mu = jax.random.uniform(k_mu, (mu_dim,), dtype=jnp.float32)
    seed = int(jax.random.randint(k_seed, (), 0, 2**31 - 1))

    actions = random_policy_forward(
        states, mu, explore=True,
        action_dim=action_dim, action_space=action_space, seed=seed,
    )
    actions = jax.block_until_ready(actions)

    assert actions.shape == (batch, action_dim), actions.shape
    assert actions.dtype == jnp.float32, actions.dtype
    assert bool(jnp.all(actions >= action_space[0])), "values below low"
    assert bool(jnp.all(actions < action_space[1])), "values at/above high"
    assert bool(jnp.std(actions) > 0.0), "degenerate (constant) samples"

    print("KERNEL_OK")
</pallas_src>

<mosaic_0001>
module attributes {stable_mosaic.version = 11 : i64} {
  func.func @_bits_action_kernel(%arg0: i32, %arg1: memref<8x512xi32, #tpu.memory_space<vmem>>, %arg2: memref<8x512xf32, #tpu.memory_space<vmem>>) attributes {dimension_semantics = [#tpu.dimension_semantics<arbitrary>], iteration_bounds = array<i64: 1>, scalar_prefetch = 0 : i64, scratch_operands = 0 : i64, tpu.core_type = #tpu.core_type<tc>, window_params = [{transform_indices = @transform_0, window_bounds = array<i64: 8, 512>}, {transform_indices = @transform_1, window_bounds = array<i64: 8, 512>}]} {
    %c0 = arith.constant 0 : index
    %c0_0 = arith.constant 0 : index
    %0 = vector.load %arg1[%c0, %c0_0] : memref<8x512xi32, #tpu.memory_space<vmem>>, vector<8x512xi32>
    %c9_i32 = arith.constant 9 : i32
    %1 = vector.broadcast %c9_i32 : i32 to vector<8x512xi32>
    %2 = arith.shrui %0, %1 : vector<8x512xi32>
    %c1065353216_i32 = arith.constant 1065353216 : i32
    %3 = vector.broadcast %c1065353216_i32 : i32 to vector<8x512xi32>
    %4 = arith.ori %2, %3 : vector<8x512xi32>
    %5 = tpu.bitcast %4 : vector<8x512xi32> -> vector<8x512xf32>
    %cst = arith.constant 1.000000e+00 : f32
    %6 = vector.broadcast %cst : f32 to vector<8x512xf32>
    %7 = arith.subf %5, %6 : vector<8x512xf32>
    %cst_1 = arith.constant 2.000000e+00 : f32
    %8 = vector.broadcast %cst_1 : f32 to vector<8x512xf32>
    %9 = arith.mulf %7, %8 : vector<8x512xf32>
    %cst_2 = arith.constant -1.000000e+00 : f32
    %10 = vector.broadcast %cst_2 : f32 to vector<8x512xf32>
    %11 = arith.addf %9, %10 : vector<8x512xf32>
    %cst_3 = arith.constant 0.99999994 : f32
    %12 = vector.broadcast %cst_3 : f32 to vector<8x512xf32>
    %13 = arith.minimumf %11, %12 : vector<8x512xf32>
    %c0_4 = arith.constant 0 : index
    %c0_5 = arith.constant 0 : index
    %14 = vector.load %arg2[%c0_4, %c0_5] : memref<8x512xf32, #tpu.memory_space<vmem>>, vector<8x512xf32>
    tpu.vector_store %arg2[%c0_4, %c0_5], %13 {strides = array<i32>} : memref<8x512xf32, #tpu.memory_space<vmem>>, vector<8x512xf32>,
    return
  }
  func.func @transform_0(%arg0: i32) -> (i32, i32) {
    %c0_i32 = arith.constant 0 : i32
    %c0_i32_0 = arith.constant 0 : i32
    return %arg0, %c0_i32 : i32, i32
  }
  func.func @transform_1(%arg0: i32) -> (i32, i32) {
    %c0_i32 = arith.constant 0 : i32
    %c0_i32_0 = arith.constant 0 : i32
    return %arg0, %c0_i32 : i32, i32
  }
}

</mosaic_0001>

<llo_original>
// kernel: tpu_custom_call.1
$region0: #{tpu_custom_call.1}
  #allocation0 [shape = 'u32[]', space=smem, size = 0x4, offset = 0x4, fixed_abs, tag = 'smem constant byte address 0x4 - core index']
  #allocation1 [shape = 'u32[144,128]{1,0:T(1,128)}', space=vmem, size = 0x12000, scoped, tag = 'internal scratch']
  %s0 = inlined_call_operand.hbm [shape: u32[8,512], index: 0, kind: input, shape index: {}]
  %s1 = inlined_call_operand.hbm [shape: f32[8,512], index: 1, kind: output, shape index: {}]
  %s2 = sld [smem:[#allocation0]]
  $region18: #{tpu_custom_call.1} parent=0
    _
  %s4 = ssub.s32 1, %s2
  %s5 = scalar_select 0, %s4, %s2
  $region1: #{tpu_custom_call.1} parent=0
    #allocation2 [shape = 'u8[16384]{0}', space=vmem, size = 0x4000, scoped, tag = 'input window, operand 0, single buffered']
    #allocation3 [shape = 's32[1]{0}', space=sflag, size = 0x4, scoped, tag = 'scoped memory for tpu_custom_call.1']
    #allocation4 [shape = 's32[1]{0}', space=sflag, size = 0x4, scoped, tag = 'scoped memory for tpu_custom_call.1']
    #allocation5 [shape = 'u8[16384]{0}', space=vmem, size = 0x4000, scoped, tag = 'output window, operand 0, single buffered']
    %6 = vsyncpa [#allocation3], 0
    %7 = vsyncpa [#allocation4], 0
    // Predicated region
    $region2: #{tpu_custom_call.1} parent=1 // pred_check
      _
    $region3: #{tpu_custom_call.1} parent=1 // pred_check_branch
      %9 = sbr.rel (0) target = $region5
    $region4: #{tpu_custom_call.1} parent=1 // pred_region
      %s11 = ssub.s32 512, 512
      %12 = vsyncadd [#allocation3], %s11
      %s14 = sshll.u32 [#allocation2], 4
      %s15 = int_to_ptr.vmem [resolvable:$true] %s14
      %17 = dma.hbm_to_vmem [thread:$0]  %s0, 512, %s15, [#allocation3]
    $region5: #{tpu_custom_call.1} parent=1 // pred_fallthru
      _
    // Predicated region
    $region6: #{tpu_custom_call.1} parent=1 // pred_check
      _
    $region7: #{tpu_custom_call.1} parent=1 // pred_check_branch
      %19 = sbr.rel (0) target = $region9
    $region8: #{tpu_custom_call.1} parent=1 // pred_region
      %20 = dma.done [#allocation3], 512
    $region9: #{tpu_custom_call.1} parent=1 // pred_fallthru
      _
    %v21 = vld [vmem:[#allocation2] sm:$0xff]
    %v22 = vld [vmem:[#allocation2 + $0x8] sm:$0xff]
    %v23 = vld [vmem:[#allocation2 + $0x10] sm:$0xff]
    %v24 = vld [vmem:[#allocation2 + $0x18] sm:$0xff]
    %v25 = vshrl.u32 %v21, 9
    %v26 = vshrl.u32 %v22, 9
    %v27 = vshrl.u32 %v23, 9
    %v28 = vshrl.u32 %v24, 9
    %v29 = vor.u32 %v25, 1065353216
    %v30 = vor.u32 %v26, 1065353216
    %v31 = vor.u32 %v27, 1065353216
    %v32 = vor.u32 %v28, 1065353216
    %v37 = vsub.f32 %v29, 1.0
    %v38 = vsub.f32 %v30, 1.0
    %v39 = vsub.f32 %v31, 1.0
    %v40 = vsub.f32 %v32, 1.0
    %v41 = vmul.f32 %v37, 2.0
    %v42 = vmul.f32 %v38, 2.0
    %v43 = vmul.f32 %v39, 2.0
    %v44 = vmul.f32 %v40, 2.0
    %v45 = vadd.f32 %v41, -1.0
    %v46 = vadd.f32 %v42, -1.0
    %v47 = vadd.f32 %v43, -1.0
    %v48 = vadd.f32 %v44, -1.0
    %v49 = vmin.f32 %v45, 0.99999994
    %v50 = vmin.f32 %v46, 0.99999994
    %v51 = vmin.f32 %v47, 0.99999994
    %v52 = vmin.f32 %v48, 0.99999994
    %53 = vst [vmem:[#allocation5] sm:$0xff] %v49
    %54 = vst [vmem:[#allocation5 + $0x8] sm:$0xff] %v50
    %55 = vst [vmem:[#allocation5 + $0x10] sm:$0xff] %v51
    %56 = vst [vmem:[#allocation5 + $0x18] sm:$0xff] %v52
    // Predicated region
    $region10: #{tpu_custom_call.1} parent=1 // pred_check
      _
    $region11: #{tpu_custom_call.1} parent=1 // pred_check_branch
      %58 = sbr.rel (0) target = $region13
    $region12: #{tpu_custom_call.1} parent=1 // pred_region
      %s60 = ssub.s32 512, 512
      %61 = vsyncadd [#allocation4], %s60
      %s63 = sshll.u32 [#allocation5], 4
      %s64 = int_to_ptr.vmem [resolvable:$true] %s63
      %66 = dma.vmem_to_hbm [thread:$0]  %s64, 512, %s1, [#allocation4]
    $region13: #{tpu_custom_call.1} parent=1 // pred_fallthru
      _
    // Predicated region
    $region14: #{tpu_custom_call.1} parent=1 // pred_check
      _
    $region15: #{tpu_custom_call.1} parent=1 // pred_check_branch
      %68 = sbr.rel (0) target = $region17
    $region16: #{tpu_custom_call.1} parent=1 // pred_region
      %69 = dma.done [#allocation4], 512
    $region17: #{tpu_custom_call.1} parent=1 // pred_fallthru
      _
    %70 = vsyncpa [#allocation3], 1
    %71 = vsyncpa [#allocation4], 1

</llo_original>
